<compile_context>
chip_gen: v7x
topology: tpu7x:2x2x1
jax: 0.10.0
libtpu: 0.0.40
codegen_flags: <defaults>
</compile_context>

<pallas_src>
import functools

import jax
import jax.numpy as jnp
from jax import lax
from jax.experimental import pallas as pl
from jax.experimental.pallas import tpu as pltpu


def _round_up(x, m):
    return (x + m - 1) // m * m


_MAX_TM = 2048  # lanes (pixels) per tile; sweep per generation if needed.


# ----------------------------------------------------------------------------
# Pallas kernel: fused conv-as-matmul + bias + ReLU + per-tile feature sums
# ----------------------------------------------------------------------------
def _conv_relu_sum_kernel(x_ref, w_ref, b_ref, feat_ref, psum_ref, *, m_rem):
    """One (image n, pixel-tile i) grid step.

    x_ref:    (1, K, TM)      bf16  transposed im2col slab tile (K on sublanes)
    w_ref:    (Cout, K)       bf16  flattened 3x3 weight (VMEM-resident)
    b_ref:    (Cout, 1)       f32   bias (VMEM-resident)
    feat_ref: (1, Cout, TM)   bf16  conv + ReLU features (lane-dense pixels)
    psum_ref: (1, 1, Cout, 1) f32   per-tile partial feature sums
    """
    acc = jnp.dot(w_ref[...], x_ref[0],
                  preferred_element_type=jnp.float32)      # (Cout, TM), MXU
    acc = jnp.maximum(acc + b_ref[...], 0.0)               # bias + ReLU (VPU)
    feat_ref[0] = acc.astype(feat_ref.dtype)               # bf16 write-back

    cout = acc.shape[0]
    # Fused training-loss reduction: partial sum over this tile's pixels.
    psum_ref[...] = jnp.sum(acc, axis=1, keepdims=True).reshape(1, 1, cout, 1)

    if m_rem:  # static: only emitted when M % TM != 0
        # Only the ragged last M-tile carries zero-padded pixels, whose
        # activations are relu(0*W + b) != 0 -> mask them out of the sum.
        @pl.when(pl.program_id(1) == pl.num_programs(1) - 1)
        def _():
            lane = lax.broadcasted_iota(jnp.int32, acc.shape, 1)
            masked = jnp.where(lane < m_rem, acc, 0.0)
            psum_ref[...] = jnp.sum(masked, axis=1,
                                    keepdims=True).reshape(1, 1, cout, 1)


# ----------------------------------------------------------------------------
# Wrapper around pallas_call
# ----------------------------------------------------------------------------
@jax.jit
def conv3x3_relu_fused(x_nchw, w_t, b_col):
    """3x3 conv (stride 1, pad 1) + bias + ReLU + fused global feature sum.

    x_nchw: (N, Cin, H, W) f32, NCHW (PyTorch-native; no layout transposes)
    w_t:    (Cout, 9*Cin)  bf16  flattened + transposed conv weight
    b_col:  (Cout, 1)      f32   bias
    Returns (features (N, Cout, H, W) bf16, total activation sum f32 scalar).
    """
    N, cin, H, W = x_nchw.shape
    cout, K = w_t.shape
    assert K == 9 * cin
    M = H * W
    TM = min(_MAX_TM, _round_up(M, 128))   # lane-dense pixel tile
    M_pad = _round_up(M, TM)
    n_tiles = M_pad // TM
    m_rem = M % TM

    # Transposed im2col in the wrapper: K on sublanes, pixels on lanes.  XLA
    # fuses the pad + slices + concat into a single slab-build pass; there is
    # no NCHW<->NHWC transpose and no lane padding of K.
    # TODO(synk): for large real backbones, move the 3x3 halo gather into the
    # kernel (spatial tiles + 1-row halo DMA) to drop the 9x slab traffic.
    xb = x_nchw.astype(jnp.bfloat16)
    x_halo = jnp.pad(xb, ((0, 0), (0, 0), (1, 1), (1, 1)))
    taps = [x_halo[:, :, dy:dy + H, dx:dx + W].reshape(N, cin, M)
            for dy in range(3) for dx in range(3)]
    slab = jnp.concatenate(taps, axis=1)                    # (N, 9*Cin, M)
    if M_pad > M:
        slab = jnp.pad(slab, ((0, 0), (0, 0), (0, M_pad - M)))

    kernel = functools.partial(_conv_relu_sum_kernel, m_rem=m_rem)
    feat_slab, psums = pl.pallas_call(
        kernel,
        out_shape=(jax.ShapeDtypeStruct((N, cout, M_pad), jnp.bfloat16),
                   jax.ShapeDtypeStruct((N, n_tiles, cout, 1), jnp.float32)),
        grid=(N, n_tiles),
        in_specs=[
            pl.BlockSpec((1, K, TM), lambda n, i: (n, 0, i)),
            pl.BlockSpec((cout, K), lambda n, i: (0, 0)),    # resident weight
            pl.BlockSpec((cout, 1), lambda n, i: (0, 0)),    # resident bias
        ],
        out_specs=[
            pl.BlockSpec((1, cout, TM), lambda n, i: (n, 0, i)),
            pl.BlockSpec((1, 1, cout, 1), lambda n, i: (n, i, 0, 0)),
        ],
        compiler_params=pltpu.CompilerParams(
            dimension_semantics=("parallel", "parallel")),
    )(slab, w_t, b_col)

    feat = feat_slab if M_pad == M else feat_slab[..., :M]
    feat = feat.reshape(N, cout, H, W)      # contiguous reshape, stays NCHW
    total = jnp.sum(psums)                  # tiny (N * n_tiles * Cout) reduce
    return feat, total


# ----------------------------------------------------------------------------
# BaseDetector port (dispatch semantics preserved from the PyTorch class)
# ----------------------------------------------------------------------------
class BaseDetectorPallas:
    def __init__(self, in_channels=4, out_channels=8, seed=0):
        # TODO(synk): @auto_fp16 mixed-precision decorator not ported.
        self.fp16_enabled = False
        self.in_channels = in_channels
        self.out_channels = out_channels

        key = jax.random.PRNGKey(seed)
        kw, kb = jax.random.split(key)
        # deterministic synthetic "backbone" params: 3x3 conv, Cin -> Cout
        self.weight = (jax.random.normal(kw, (3, 3, in_channels, out_channels),
                                         jnp.float32) * 0.1)
        self.bias = (jax.random.normal(kb, (1, out_channels),
                                       jnp.float32) * 0.01)

        # Pre-flatten + transpose the weight once: (Cout, 9*Cin) bf16 for the
        # MXU LHS; row order (dy, dx, cin) matches the wrapper's tap order.
        k = 9 * in_channels
        self.w_t = self.weight.reshape(k, out_channels).T.astype(jnp.bfloat16)
        self.b_col = self.bias.reshape(out_channels, 1)     # (Cout, 1) f32

        self.neck = None
        self.bbox_head = None
        self.mask_head = None
        self.shared_head = None

    # ----- properties mirroring the original module -----
    @property
    def with_neck(self):
        return getattr(self, 'neck', None) is not None

    @property
    def with_shared_head(self):
        return getattr(self, 'shared_head', None) is not None

    @property
    def with_bbox(self):
        return getattr(self, 'bbox_head', None) is not None

    @property
    def with_mask(self):
        return getattr(self, 'mask_head', None) is not None

    def init_weights(self, pretrained=None):
        # TODO(synk): no checkpoint loading; weights are synthetic/deterministic.
        pass

    # ----- abstract methods given a minimal concrete implementation -----
    def extract_feat(self, img):
        # img: (N, C, H, W) NCHW, mean-centered/std-scaled per the docstring.
        feat, _ = conv3x3_relu_fused(img, self.w_t, self.b_col)
        return feat

    def extract_feats(self, imgs):
        assert isinstance(imgs, list)
        for img in imgs:
            yield self.extract_feat(img)

    def forward_train(self, imgs, img_metas, **kwargs):
        # synthetic training objective: mean feature activation.  The global
        # sum is produced by the SAME fused kernel launch as the conv — no
        # second pallas_call, no feature re-read.
        n, _, h, w = imgs.shape
        _, total = conv3x3_relu_fused(imgs, self.w_t, self.b_col)
        loss = total / jnp.float32(n * self.out_channels * h * w)
        return {'loss_feat': loss}

    def simple_test(self, img, img_meta, **kwargs):
        return self.extract_feat(img)

    def aug_test(self, imgs, img_metas, **kwargs):
        # TODO(synk): test-time augmentation merge has no kernel-level
        # equivalent here; fall back to the first augmentation.
        return self.simple_test(imgs[0], img_metas[0], **kwargs)

    # ----- dispatch logic reproduced from BaseDetector -----
    def forward_test(self, imgs, img_metas, **kwargs):
        for var, name in [(imgs, 'imgs'), (img_metas, 'img_metas')]:
            if not isinstance(var, list):
                raise TypeError('{} must be a list, but got {}'.format(
                    name, type(var)))
        num_augs = len(imgs)
        if num_augs != len(img_metas):
            raise ValueError(
                'num of augmentations ({}) != num of image meta ({})'.format(
                    len(imgs), len(img_metas)))
        imgs_per_gpu = imgs[0].shape[0]
        assert imgs_per_gpu == 1
        if num_augs == 1:
            return self.simple_test(imgs[0], img_metas[0], **kwargs)
        else:
            return self.aug_test(imgs, img_metas, **kwargs)

    def forward(self, img, img_meta, return_loss=True, **kwargs):
        if return_loss:
            return self.forward_train(img, img_meta, **kwargs)
        else:
            return self.forward_test(img, img_meta, **kwargs)

    # show_result is pure matplotlib/opencv visualization -> not translatable.


# ----------------------------------------------------------------------------
if __name__ == "__main__":
    key = jax.random.PRNGKey(0)
    k1, k2 = jax.random.split(key)

    detector = BaseDetectorPallas(in_channels=4, out_channels=8, seed=0)

    # training path: batch of 2 images, NCHW (2, 4, 16, 16)
    img_train = jax.random.normal(k1, (2, 4, 16, 16), jnp.float32)
    img_metas_train = [dict(img_shape=(16, 16, 3), scale_factor=1.0,
                            flip=False) for _ in range(2)]
    losses = detector.forward(img_train, img_metas_train, return_loss=True)
    jax.block_until_ready(losses['loss_feat'])

    # test path: list of single-image tensors (imgs_per_gpu == 1)
    img_test = jax.random.normal(k2, (1, 4, 16, 16), jnp.float32)
    img_metas_test = [[dict(img_shape=(16, 16, 3), scale_factor=1.0,
                            flip=False)]]
    feats = detector.forward([img_test], img_metas_test, return_loss=False)
    jax.block_until_ready(feats)

    assert feats.shape == (1, 8, 16, 16)
    assert losses['loss_feat'].shape == ()
    print("KERNEL_OK")
</pallas_src>

<mosaic_0001>
module attributes {stable_mosaic.version = 11 : i64} {
  func.func @_conv_relu_sum_kernel(%arg0: i32, %arg1: i32, %arg2: memref<1x36x256xbf16, #tpu.memory_space<vmem>>, %arg3: memref<8x36xbf16, #tpu.memory_space<vmem>>, %arg4: memref<8x1xf32, #tpu.memory_space<vmem>>, %arg5: memref<1x8x256xbf16, #tpu.memory_space<vmem>>, %arg6: memref<1x1x8x1xf32, #tpu.memory_space<vmem>>) attributes {dimension_semantics = [#tpu.dimension_semantics<parallel>, #tpu.dimension_semantics<parallel>], iteration_bounds = array<i64: 2, 1>, scalar_prefetch = 0 : i64, scratch_operands = 0 : i64, tpu.core_type = #tpu.core_type<tc>, window_params = [{transform_indices = @transform_0, window_bounds = array<i64: 1, 36, 256>}, {pipeline_mode = #tpu.pipeline_mode<synchronous>, transform_indices = @transform_1, window_bounds = array<i64: 8, 36>}, {pipeline_mode = #tpu.pipeline_mode<synchronous>, transform_indices = @transform_2, window_bounds = array<i64: 8, 1>}, {transform_indices = @transform_3, window_bounds = array<i64: 1, 8, 256>}, {transform_indices = @transform_4, window_bounds = array<i64: 1, 1, 8, 1>}]} {
    %c0 = arith.constant 0 : index
    %c0_0 = arith.constant 0 : index
    %0 = vector.load %arg3[%c0, %c0_0] : memref<8x36xbf16, #tpu.memory_space<vmem>>, vector<8x36xbf16>
    %c0_1 = arith.constant 0 : index
    %c0_2 = arith.constant 0 : index
    %c0_3 = arith.constant 0 : index
    %1 = vector.load %arg2[%c0_1, %c0_2, %c0_3] : memref<1x36x256xbf16, #tpu.memory_space<vmem>>, vector<1x36x256xbf16>
    %2 = vector.shape_cast %1 : vector<1x36x256xbf16> to vector<36x256xbf16>
    %cst = arith.constant dense<0.000000e+00> : vector<8x256xf32>
    %3 = tpu.matmul %0, %2, %cst {dimension_numbers = #tpu.dot_dimension_numbers<[1], [0], [0], [1], [0, 0, 1, 1], [], []>} : vector<8x36xbf16>, vector<36x256xbf16>, vector<8x256xf32> -> vector<8x256xf32>
    %c0_4 = arith.constant 0 : index
    %c0_5 = arith.constant 0 : index
    %4 = vector.load %arg4[%c0_4, %c0_5] : memref<8x1xf32, #tpu.memory_space<vmem>>, vector<8x1xf32>
    %5 = vector.broadcast %4 : vector<8x1xf32> to vector<8x256xf32>
    %6 = arith.addf %3, %5 : vector<8x256xf32>
    %cst_6 = arith.constant 0.000000e+00 : f32
    %7 = vector.broadcast %cst_6 : f32 to vector<8x256xf32>
    %8 = arith.maximumf %6, %7 : vector<8x256xf32>
    %9 = arith.truncf %8 : vector<8x256xf32> to vector<8x256xbf16>
    %c0_7 = arith.constant 0 : index
    %c0_8 = arith.constant 0 : index
    %c0_9 = arith.constant 0 : index
    %10 = vector.load %arg5[%c0_7, %c0_8, %c0_9] : memref<1x8x256xbf16, #tpu.memory_space<vmem>>, vector<1x8x256xbf16>
    %11 = vector.shape_cast %10 : vector<1x8x256xbf16> to vector<8x256xbf16>
    %12 = vector.shape_cast %9 : vector<8x256xbf16> to vector<1x8x256xbf16>
    tpu.vector_store %arg5[%c0_7, %c0_8, %c0_9], %12 {strides = array<i32>} : memref<1x8x256xbf16, #tpu.memory_space<vmem>>, vector<1x8x256xbf16>,
    %cst_10 = arith.constant dense<0.000000e+00> : vector<8xf32>
    %13 = vector.multi_reduction <add>, %8, %cst_10 [1] : vector<8x256xf32> to vector<8xf32>
    %14 = vector.shape_cast %13 : vector<8xf32> to vector<8x1xf32>
    %15 = vector.shape_cast %14 : vector<8x1xf32> to vector<1x1x8x1xf32>
    %c0_11 = arith.constant 0 : index
    %c0_12 = arith.constant 0 : index
    %c0_13 = arith.constant 0 : index
    %c0_14 = arith.constant 0 : index
    %16 = vector.load %arg6[%c0_11, %c0_12, %c0_13, %c0_14] : memref<1x1x8x1xf32, #tpu.memory_space<vmem>>, vector<1x1x8x1xf32>
    tpu.vector_store %arg6[%c0_11, %c0_12, %c0_13, %c0_14], %15 {strides = array<i32>} : memref<1x1x8x1xf32, #tpu.memory_space<vmem>>, vector<1x1x8x1xf32>,
    return
  }
  func.func @transform_0(%arg0: i32, %arg1: i32) -> (i32, i32, i32) {
    %c0_i32 = arith.constant 0 : i32
    %c0_i32_0 = arith.constant 0 : i32
    return %arg0, %c0_i32, %arg1 : i32, i32, i32
  }
  func.func @transform_1(%arg0: i32, %arg1: i32) -> (i32, i32) {
    %c0_i32 = arith.constant 0 : i32
    %c0_i32_0 = arith.constant 0 : i32
    %c0_i32_1 = arith.constant 0 : i32
    return %c0_i32, %c0_i32_0 : i32, i32
  }
  func.func @transform_2(%arg0: i32, %arg1: i32) -> (i32, i32) {
    %c0_i32 = arith.constant 0 : i32
    %c0_i32_0 = arith.constant 0 : i32
    %c0_i32_1 = arith.constant 0 : i32
    return %c0_i32, %c0_i32_0 : i32, i32
  }
  func.func @transform_3(%arg0: i32, %arg1: i32) -> (i32, i32, i32) {
    %c0_i32 = arith.constant 0 : i32
    %c0_i32_0 = arith.constant 0 : i32
    return %arg0, %c0_i32, %arg1 : i32, i32, i32
  }
  func.func @transform_4(%arg0: i32, %arg1: i32) -> (i32, i32, i32, i32) {
    %c0_i32 = arith.constant 0 : i32
    %c0_i32_0 = arith.constant 0 : i32
    %c0_i32_1 = arith.constant 0 : i32
    return %arg0, %arg1, %c0_i32, %c0_i32_0 : i32, i32, i32, i32
  }
}

</mosaic_0001>

<llo_original>
// kernel: conv3x3_relu_fused.1
$region0: #{conv3x3_relu_fused.1}
  #allocation0 [shape = 'u32[]', space=smem, size = 0x4, offset = 0x4, fixed_abs, tag = 'smem constant byte address 0x4 - core index']
  #allocation1 [shape = 'u32[144,128]{1,0:T(1,128)}', space=vmem, size = 0x12000, scoped, tag = 'internal scratch']
  %s0 = inlined_call_operand.vmem [shape: bf16[2,36,256], index: 0, kind: input, shape index: {}]
  %s1 = inlined_call_operand.vmem [shape: bf16[8,36], index: 1, kind: input, shape index: {}]
  %s2 = inlined_call_operand.vmem [shape: f32[8,1], index: 2, kind: input, shape index: {}]
  %s3 = inlined_call_operand.vmem [shape: bf16[2,8,256], index: 3, kind: output, shape index: {0}]
  %s4 = inlined_call_operand.vmem [shape: f32[2,1,8,1], index: 4, kind: output, shape index: {1}]
  %5 = xla_tuple %s3, %s4
  %s6 = sld [smem:[#allocation0]]
  $region53: #{conv3x3_relu_fused.1} parent=0
    _
  %s8 = ssub.s32 1, %s6
  %s9 = scalar_select 0, %s8, %s6
  loop: start=0, step=1, limit=4
  $region2: #{conv3x3_relu_fused.1} parent=0 // loop_pre_header
    _
  $region3: #{conv3x3_relu_fused.1} parent=0 // loop_header
    %s11 = sphi 0, %s15
    %p12 = scmp.ge.s32.totalorder %s11, 4
    %s18 = sphi 0, %s30
    %s19 = sphi 0, %s26
    %s20 = sphi 0, %s18
    %s21 = sphi 0, %s19
    %s22 = sphi 0, %s20
    %s23 = sphi 0, %s21
    %s35 = sphi 0, %s37
    %s38 = sphi 0, %s35
    %s39 = sphi 0, %s38
    %s55 = sphi 0, %s39
    %s59 = sphi 0, %s59
    %s61 = sphi 0, %s59
    %s62 = sphi 0, %s61
    %s76 = sphi 0, %s62
    %s80 = sphi 0, %s80
    %s82 = sphi 0, %s80
    %s83 = sphi 0, %s82
    %s97 = sphi 0, %s83
    %s105 = sphi 0, %s107
    %s108 = sphi 0, %s105
    %s109 = sphi 0, %s108
    %s125 = sphi 0, %s109
    %s133 = sphi 0, %s135
    %s136 = sphi 0, %s133
    %s137 = sphi 0, %s136
    %s153 = sphi 0, %s137
  $region4: #{conv3x3_relu_fused.1} parent=0 // loop_header_branch
    %14 = sbr.rel (%p12) target = $region8
  $region5: #{conv3x3_relu_fused.1} parent=0 // loop_body
    %s16 = ssub.s32 %s11, 1
    %s17 = ssub.s32 %s11, 2
    %s24 = sadd.s32 1, %s19
    %p25 = scmp.ge.s32.totalorder %s24, 1
    %s26 = scalar_select %p25, 0, %s24
    %s27 = sadd.s32 1, %s18
    %s28 = scalar_select %p25, %s27, %s18
    %p29 = scmp.ge.s32.totalorder %s28, 2
    %s30 = scalar_select %p29, 0, %s28
    %s31 = ssub.s32 %s18, %s30
    %s32 = ssub.s32 %s19, %s26
    %s33 = sor.u32 %s31, %s32
    %p34 = scmp.eq.s32.totalorder %s33, 0
    %s36 = sadd.s32 %s35, 1
    %s37 = scalar_select %p34, %s35, %s36
    %p40 = pneg %p34
    %p41 = scmp.eq.s32.totalorder %s11, 1
    %p42 = por %p40, %p41
    %p43 = scmp.ne.s32.totalorder %s35, %s38
    %p44 = scmp.eq.s32.totalorder %s11, 0
    %p45 = por %p43, %p44
    %p46 = scmp.ne.s32.totalorder %s35, %s38
    %p47 = scmp.eq.s32.totalorder %s16, 1
    %p48 = por %p46, %p47
    %p49 = scmp.ne.s32.totalorder %s38, %s39
    %p50 = scmp.eq.s32.totalorder %s16, 0
    %p51 = por %p49, %p50
    %p52 = scmp.ne.s32.totalorder %s38, %s39
    %p53 = scmp.eq.s32.totalorder %s17, 1
    %p54 = por %p52, %p53
    %p56 = scmp.ne.s32.totalorder %s39, %s55
    %p57 = scmp.eq.s32.totalorder %s17, 0
    %p58 = por %p56, %p57
    %s60 = sadd.s32 %s59, 1
    %p63 = scmp.eq.s32.totalorder %s11, 1
    %p64 = scmp.ne.s32.totalorder %s59, %s61
    %p65 = scmp.eq.s32.totalorder %s11, 0
    %p66 = por %p64, %p65
    %p67 = scmp.ne.s32.totalorder %s59, %s61
    %p68 = scmp.eq.s32.totalorder %s16, 1
    %p69 = por %p67, %p68
    %p70 = scmp.ne.s32.totalorder %s61, %s62
    %p71 = scmp.eq.s32.totalorder %s16, 0
    %p72 = por %p70, %p71
    %p73 = scmp.ne.s32.totalorder %s61, %s62
    %p74 = scmp.eq.s32.totalorder %s17, 1
    %p75 = por %p73, %p74
    %p77 = scmp.ne.s32.totalorder %s62, %s76
    %p78 = scmp.eq.s32.totalorder %s17, 0
    %p79 = por %p77, %p78
    %s81 = sadd.s32 %s80, 1
    %p84 = scmp.eq.s32.totalorder %s11, 1
    %p85 = scmp.ne.s32.totalorder %s80, %s82
    %p86 = scmp.eq.s32.totalorder %s11, 0
    %p87 = por %p85, %p86
    %p88 = scmp.ne.s32.totalorder %s80, %s82
    %p89 = scmp.eq.s32.totalorder %s16, 1
    %p90 = por %p88, %p89
    %p91 = scmp.ne.s32.totalorder %s82, %s83
    %p92 = scmp.eq.s32.totalorder %s16, 0
    %p93 = por %p91, %p92
    %p94 = scmp.ne.s32.totalorder %s82, %s83
    %p95 = scmp.eq.s32.totalorder %s17, 1
    %p96 = por %p94, %p95
    %p98 = scmp.ne.s32.totalorder %s83, %s97
    %p99 = scmp.eq.s32.totalorder %s17, 0
    %p100 = por %p98, %p99
    %s101 = ssub.s32 %s18, %s30
    %s102 = ssub.s32 %s19, %s26
    %s103 = sor.u32 %s101, %s102
    %p104 = scmp.eq.s32.totalorder %s103, 0
    %s106 = sadd.s32 %s105, 1
    %s107 = scalar_select %p104, %s105, %s106
    %p110 = pneg %p104
    %p111 = scmp.eq.s32.totalorder %s11, 1
    %p112 = por %p110, %p111
    %p113 = scmp.ne.s32.totalorder %s105, %s108
    %p114 = scmp.eq.s32.totalorder %s11, 0
    %p115 = por %p113, %p114
    %p116 = scmp.ne.s32.totalorder %s105, %s108
    %p117 = scmp.eq.s32.totalorder %s16, 1
    %p118 = por %p116, %p117
    %p119 = scmp.ne.s32.totalorder %s108, %s109
    %p120 = scmp.eq.s32.totalorder %s16, 0
    %p121 = por %p119, %p120
    %p122 = scmp.ne.s32.totalorder %s108, %s109
    %p123 = scmp.eq.s32.totalorder %s17, 1
    %p124 = por %p122, %p123
    %p126 = scmp.ne.s32.totalorder %s109, %s125
    %p127 = scmp.eq.s32.totalorder %s17, 0
    %p128 = por %p126, %p127
    %s129 = ssub.s32 %s18, %s30
    %s130 = ssub.s32 %s19, %s26
    %s131 = sor.u32 %s129, %s130
    %p132 = scmp.eq.s32.totalorder %s131, 0
    %s134 = sadd.s32 %s133, 1
    %s135 = scalar_select %p132, %s133, %s134
    %p138 = pneg %p132
    %p139 = scmp.eq.s32.totalorder %s11, 1
    %p140 = por %p138, %p139
    %p141 = scmp.ne.s32.totalorder %s133, %s136
    %p142 = scmp.eq.s32.totalorder %s11, 0
    %p143 = por %p141, %p142
    %p144 = scmp.ne.s32.totalorder %s133, %s136
    %p145 = scmp.eq.s32.totalorder %s16, 1
    %p146 = por %p144, %p145
    %p147 = scmp.ne.s32.totalorder %s136, %s137
    %p148 = scmp.eq.s32.totalorder %s16, 0
    %p149 = por %p147, %p148
    %p150 = scmp.ne.s32.totalorder %s136, %s137
    %p151 = scmp.eq.s32.totalorder %s17, 1
    %p152 = por %p150, %p151
    %p154 = scmp.ne.s32.totalorder %s137, %s153
    %p155 = scmp.eq.s32.totalorder %s17, 0
    %p156 = por %p154, %p155
    %p157 = scmp.le.s32.totalorder 1, %s11
    %p158 = scmp.lt.s32.totalorder %s11, 3
    %p159 = pnand %p157, %p158
    %p160 = pneg %p159
    // Predicated region
    $region9: #{conv3x3_relu_fused.1} parent=5 // pred_check
      _
    $region10: #{conv3x3_relu_fused.1} parent=5 // pred_check_branch
      %162 = sbr.rel (%p159) target = $region12
    $region11: #{conv3x3_relu_fused.1} parent=5 // pred_region
      %s163 = ssub.s32 %s11, 1
      // Predicated region
      $region13: #{conv3x3_relu_fused.1} parent=11 // pred_check
        %p164 = pneg %p72
      $region14: #{conv3x3_relu_fused.1} parent=11 // pred_check_branch
        %166 = sbr.rel (%p164) target = $region16
      $region15: #{conv3x3_relu_fused.1} parent=11 // pred_region
        _
      $region16: #{conv3x3_relu_fused.1} parent=11 // pred_fallthru
        _
      // Predicated region
      $region17: #{conv3x3_relu_fused.1} parent=11 // pred_check
        %p167 = pneg %p93
      $region18: #{conv3x3_relu_fused.1} parent=11 // pred_check_branch
        %169 = sbr.rel (%p167) target = $region20
      $region19: #{conv3x3_relu_fused.1} parent=11 // pred_region
        _
      $region20: #{conv3x3_relu_fused.1} parent=11 // pred_fallthru
        _
    $region12: #{conv3x3_relu_fused.1} parent=5 // pred_fallthru
      _
    %p170 = scmp.lt.s32.totalorder %s11, 2
    // Predicated region
    $region21: #{conv3x3_relu_fused.1} parent=5 // pred_check
      %p171 = pneg %p170
    $region22: #{conv3x3_relu_fused.1} parent=5 // pred_check_branch
      %173 = sbr.rel (%p171) target = $region24
    $region23: #{conv3x3_relu_fused.1} parent=5 // pred_region
      // Predicated region
      $region25: #{conv3x3_relu_fused.1} parent=23 // pred_check
        %p174 = pneg %p45
      $region26: #{conv3x3_relu_fused.1} parent=23 // pred_check_branch
        %176 = sbr.rel (%p174) target = $region28
      $region27: #{conv3x3_relu_fused.1} parent=23 // pred_region
        %s177 = smul.u32 2, %s19
        %p178 = scmp.lt.s32.totalorder %s18, 1
        %s179 = scalar_select %p178, %s18, 1
        %p180 = scmp.lt.s32.totalorder %s177, 1
        %s181 = scalar_select %p180, %s177, 1
        %s182 = smul.addr %s179, 10
        %s183 = sadd.s32 %s181, %s182
        %s184 = smul.addr %s183, 4
        %s185 = scalar_lea.vmem %s0, %s184
        %s186 = smul.u32 2, %s19
      $region28: #{conv3x3_relu_fused.1} parent=23 // pred_fallthru
        _
    $region24: #{conv3x3_relu_fused.1} parent=5 // pred_fallthru
      _
    %p187 = scmp.le.s32.totalorder 1, %s11
    %p188 = scmp.lt.s32.totalorder %s11, 3
    %p189 = pnand %p187, %p188
    %p190 = pneg %p189
    // Predicated region
    $region29: #{conv3x3_relu_fused.1} parent=5 // pred_check
      _
    $region30: #{conv3x3_relu_fused.1} parent=5 // pred_check_branch
      %192 = sbr.rel (%p189) target = $region32
    $region31: #{conv3x3_relu_fused.1} parent=5 // pred_region
      %s193 = ssub.s32 %s11, 1
      %s194 = smul.u32 2, %s21
      %p195 = scmp.lt.s32.totalorder %s20, 1
      %s196 = scalar_select %p195, %s20, 1
      %p197 = scmp.lt.s32.totalorder %s194, 1
      %s198 = scalar_select %p197, %s194, 1
      %s199 = smul.addr %s196, 10
      %s200 = sadd.s32 %s198, %s199
      %s201 = smul.addr %s200, 4
      %s202 = scalar_lea.vmem %s0, %s201
      %p203 = pneg %p51
      %p204 = pneg %p48
      %p205 = pneg %p72
      %p206 = pneg %p69
      %p207 = pneg %p93
      %p208 = pneg %p90
      %p209 = pneg %p121
      %p210 = pneg %p118
      %s211 = smul.u32 2, %s21
      %p212 = scmp.lt.s32.totalorder %s20, 1
      %s213 = scalar_select %p212, %s20, 1
      %p214 = scmp.lt.s32.totalorder %s211, 1
      %s215 = scalar_select %p214, %s211, 1
      %s216 = smul.addr %s213, 2
      %s217 = sadd.s32 %s215, %s216
      %s218 = smul.addr %s217, 4
      %s219 = scalar_lea.vmem %s3, %s218
      %p220 = pneg %p149
      %p221 = pneg %p146
      %p222 = scmp.lt.s32.totalorder %s20, 1
      %s223 = scalar_select %p222, %s20, 1
      %p224 = scmp.lt.s32.totalorder %s21, 0
      %s225 = scalar_select %p224, %s21, 0
      %s226 = sadd.s32 %s225, %s223
      %s227 = smul.addr %s226, 8
      %s228 = scalar_lea.vmem %s4, %s227
      %s229 = smul.u32 2, %s21
      %p230 = scmp.lt.s32.totalorder %s20, 1
      %s231 = scalar_select %p230, %s20, 1
      %p232 = scmp.lt.s32.totalorder %s229, 1
      %s233 = scalar_select %p232, %s229, 1
      %s234 = smul.addr %s231, 10
      %s235 = sadd.s32 %s233, %s234
      %s236 = smul.addr %s235, 4
      %s237 = scalar_lea.vmem %s0, %s236
      %s238 = smul.u32 2, %s21
      %s239 = smul.u32 2, %s21
      %p240 = scmp.lt.s32.totalorder %s20, 1
      %s241 = scalar_select %p240, %s20, 1
      %p242 = scmp.lt.s32.totalorder %s239, 1
      %s243 = scalar_select %p242, %s239, 1
      %s244 = smul.addr %s241, 2
      %s245 = sadd.s32 %s243, %s244
      %s246 = smul.addr %s245, 4
      %s247 = scalar_lea.vmem %s3, %s246
      %s248 = smul.u32 2, %s21
      %p249 = scmp.lt.s32.totalorder %s20, 1
      %s250 = scalar_select %p249, %s20, 1
      %p251 = scmp.lt.s32.totalorder %s21, 0
      %s252 = scalar_select %p251, %s21, 0
      %s253 = sadd.s32 %s252, %s250
      %s254 = smul.addr %s253, 8
      %s255 = scalar_lea.vmem %s4, %s254
      %v257 = vld [vmem:[%s1] sm:$0xf]
      %v258 = vld [vmem:[%s237] sm:$0xff]
      %v259 = vld [vmem:[%s237 + $0x8] sm:$0xff]
      %v260 = vld [vmem:[%s237 + $0x10] sm:$0xff]
      %v261 = vld [vmem:[%s237 + $0x18] sm:$0xff]
      %v262 = vld [vmem:[%s237 + $0x20] sm:$0x33]
      %v263 = vld [vmem:[%s2] sm:$0xff]
      %265 = vset.pattern.permute.xlu0 0
      %266 = vperm.xlu0 %265, %v263
      %v267 = vpop.permute.xlu0 %266
      %v274 = vunpack.c.l.b16 %v258
      %v275 = vunpack.c.h.b16 %v258
      %v276 = vunpack.c.l.b16 %v259
      %v277 = vunpack.c.h.b16 %v259
      %v278 = vunpack.c.l.b16 %v260
      %v279 = vunpack.c.h.b16 %v260
      %v280 = vunpack.c.l.b16 %v261
      %v281 = vunpack.c.h.b16 %v261
      %v282 = vunpack.c.l.b16 %v262
      %v283 = vunpack.c.h.b16 %v262
      %v284 = vpack.c.b16 %v276, %v274
      %v285 = vpack.c.b16 %v277, %v275
      %v286 = vpack.c.b16 %v280, %v278
      %v287 = vpack.c.b16 %v281, %v279
      %v288 = vpack.c.b16 %v282, %v282
      %v289 = vpack.c.b16 %v283, %v283
      %vm294 = vcmask 293888
      %v296 = vsel %vm294, %v257, 0
      %vm298 = vcmask 1041408
      %v300 = vsel %vm298, %v288, 0
      %v303 = vsel %vm298, %v289, 0
      %305 = vmatprep.subr.bf16.mxu0 %v285
      %306 = vmatpush1.bf16.msra.mxu0 %v284
      %307 = vmatprep.subr.bf16.mxu0 %v287
      %308 = vmatpush1.bf16.msra.mxu0 %v286
      %309 = vmatprep.subr.bf16.mxu0 %v303
      %310 = vmatpush1.bf16.msra.mxu0 %v300
      %311 = vmatprep.subr.bf16.mxu0 0
      %312 = vmatpush1.bf16.msra.mxu0 0
      %313 = vmatprep.subr.bf16.mxu0 0
      %314 = vmatpush1.bf16.msra.mxu0 0
      %315 = vmatprep.subr.bf16.mxu0 0
      %316 = vmatpush1.bf16.msra.mxu0 0
      %317 = vmatprep.subr.bf16.mxu0 0
      %318 = vmatpush1.bf16.msra.mxu0 0
      %319 = vmatprep.subr.bf16.mxu0 0
      %320 = vmatpush1.bf16.msra.mxu0 0
      %321 = vmatprep.subr.bf16.mxu0 0
      %322 = vmatpush1.bf16.msra.mxu0 0
      %323 = vmatprep.subr.bf16.mxu0 0
      %324 = vmatpush1.bf16.msra.mxu0 0
      %325 = vmatprep.subr.bf16.mxu0 0
      %326 = vmatpush1.bf16.msra.mxu0 0
      %327 = vmatprep.subr.bf16.mxu0 0
      %328 = vmatpush1.bf16.msra.mxu0 0
      %329 = vmatprep.subr.bf16.mxu0 0
      %330 = vmatpush1.bf16.msra.mxu0 0
      %331 = vmatprep.subr.bf16.mxu0 0
      %332 = vmatpush1.bf16.msra.mxu0 0
      %333 = vmatprep.subr.bf16.mxu0 0
      %334 = vmatpush1.bf16.msra.mxu0 0
      %335 = vmatprep.subr.bf16.mxu0 0
      %336 = vmatpush1.bf16.msra.mxu0 0
      %337 = vmatprep.mubr.bf16.mxu0 0
      %338 = vmatmul.mubr.bf16.gmra.mrb[0].mxu0 %v296
      %v339 = vpop.f32.mrb[0].mxu0
      %v340 = vadd.f32 %v267, %v339
      %v341 = vpop.f32.mrb[0].mxu0
      %v342 = vadd.f32 %v267, %v341
      %v343 = vpop.f32.mrb[0].mxu0
      %v344 = vpop.f32.mrb[0].mxu0
      %345 = vdwg.mxu0
      %v346 = vmax.f32 %v340, 0.0
      %v347 = vmax.f32 %v342, 0.0
      %v348 = vpack.c.bf16 %v346, %v346
      %v349 = vpack.c.bf16 %v347, %v347
      %v352 = vunpack.c.l.b16 %v348
      %v353 = vunpack.c.l.b16 %v349
      %v354 = vpack.c.b16 %v353, %v352
      %356 = vst [vmem:[%s247] sm:$0xff] %v354
      %v357 = vadd.f32 %v346, %v347
      %358 = vadd.xlane.f32.xlu0 %v357
      %v359 = vpop.xlane.xlu0 %358
      %vm360 = vcmask 7168
      %361 = vst.msk [vmem:[%s255] sm:$0xff] %vm360, %v359
      %s362 = smul.u32 2, %s21
      %p363 = scmp.lt.s32.totalorder %s20, 1
      %s364 = scalar_select %p363, %s20, 1
      %p365 = scmp.lt.s32.totalorder %s362, 1
      %s366 = scalar_select %p365, %s362, 1
      %s367 = smul.addr %s364, 2
      %s368 = sadd.s32 %s366, %s367
      %s369 = smul.addr %s368, 4
      %s370 = scalar_lea.vmem %s3, %s369
      %p371 = scmp.lt.s32.totalorder %s20, 1
      %s372 = scalar_select %p371, %s20, 1
      %p373 = scmp.lt.s32.totalorder %s21, 0
      %s374 = scalar_select %p373, %s21, 0
      %s375 = sadd.s32 %s374, %s372
      %s376 = smul.addr %s375, 8
      %s377 = scalar_lea.vmem %s4, %s376
      // Predicated region
      $region33: #{conv3x3_relu_fused.1} parent=31 // pred_check
        %p378 = pneg %p118
      $region34: #{conv3x3_relu_fused.1} parent=31 // pred_check_branch
        %380 = sbr.rel (%p378) target = $region36
      $region35: #{conv3x3_relu_fused.1} parent=31 // pred_region
        %s381 = smul.u32 2, %s21
      $region36: #{conv3x3_relu_fused.1} parent=31 // pred_fallthru
        _
      // Predicated region
      $region37: #{conv3x3_relu_fused.1} parent=31 // pred_check
        %p382 = pneg %p146
      $region38: #{conv3x3_relu_fused.1} parent=31 // pred_check_branch
        %384 = sbr.rel (%p382) target = $region40
      $region39: #{conv3x3_relu_fused.1} parent=31 // pred_region
        _
      $region40: #{conv3x3_relu_fused.1} parent=31 // pred_fallthru
        _
    $region32: #{conv3x3_relu_fused.1} parent=5 // pred_fallthru
      _
    %p385 = scmp.le.s32.totalorder 2, %s11
    // Predicated region
    $region41: #{conv3x3_relu_fused.1} parent=5 // pred_check
      %p386 = pneg %p385
    $region42: #{conv3x3_relu_fused.1} parent=5 // pred_check_branch
      %388 = sbr.rel (%p386) target = $region44
    $region43: #{conv3x3_relu_fused.1} parent=5 // pred_region
      %s389 = ssub.s32 %s11, 2
      // Predicated region
      $region45: #{conv3x3_relu_fused.1} parent=43 // pred_check
        %p390 = pneg %p124
      $region46: #{conv3x3_relu_fused.1} parent=43 // pred_check_branch
        %392 = sbr.rel (%p390) target = $region48
      $region47: #{conv3x3_relu_fused.1} parent=43 // pred_region
        %s393 = smul.u32 2, %s23
        %p394 = scmp.lt.s32.totalorder %s22, 1
        %s395 = scalar_select %p394, %s22, 1
        %p396 = scmp.lt.s32.totalorder %s393, 1
        %s397 = scalar_select %p396, %s393, 1
        %s398 = smul.addr %s395, 2
        %s399 = sadd.s32 %s397, %s398
        %s400 = smul.addr %s399, 4
        %s401 = scalar_lea.vmem %s3, %s400
      $region48: #{conv3x3_relu_fused.1} parent=43 // pred_fallthru
        _
      // Predicated region
      $region49: #{conv3x3_relu_fused.1} parent=43 // pred_check
        %p402 = pneg %p152
      $region50: #{conv3x3_relu_fused.1} parent=43 // pred_check_branch
        %404 = sbr.rel (%p402) target = $region52
      $region51: #{conv3x3_relu_fused.1} parent=43 // pred_region
        %p405 = scmp.lt.s32.totalorder %s22, 1
        %s406 = scalar_select %p405, %s22, 1
        %p407 = scmp.lt.s32.totalorder %s23, 0
        %s408 = scalar_select %p407, %s23, 0
        %s409 = sadd.s32 %s408, %s406
        %s410 = smul.addr %s409, 8
        %s411 = scalar_lea.vmem %s4, %s410
      $region52: #{conv3x3_relu_fused.1} parent=43 // pred_fallthru
        _
    $region44: #{conv3x3_relu_fused.1} parent=5 // pred_fallthru
      _
  $region6: #{conv3x3_relu_fused.1} parent=0 // loop_footer
    %s15 = sadd.s32 1, %s11
  $region7: #{conv3x3_relu_fused.1} parent=0 // loop_footer_branch
    %10 = sbr.rel target = $region3
  $region8: #{conv3x3_relu_fused.1} parent=0 // loop_exit
    _

</llo_original>
